<compile_context>
chip_gen: v5e
topology: v5e:2x2
jax: 0.10.0
libtpu: 0.0.40
codegen_flags: <defaults>
</compile_context>

<pallas_src>
import functools

import jax
import jax.numpy as jnp
from jax.experimental import pallas as pl
from jax.experimental.pallas import tpu as pltpu


# ---------------------------------------------------------------------------
# Fused single-pass kernel: pool + excite + scale (x read once, out written once)
# ---------------------------------------------------------------------------
def _se_fused_kernel(x_ref, w1_ref, w2_ref, out_ref, y_ref, *, inv_hw):
    # x_ref: (bt, C, HW)   w1_ref: (C, Cr)   w2_ref: (Cr, C)
    # out_ref: (bt, C, HW) y_ref: (bt, 1, C)

    # squeeze: global average pool, accumulated in f32 even for bf16 inputs
    y = jnp.sum(x_ref[...].astype(jnp.float32), axis=-1) * inv_hw          # (bt, C)
    y_ref[...] = y[:, None, :].astype(y_ref.dtype)

    # excitation: FC -> ReLU -> FC -> Sigmoid (tiny; hides under the x DMA)
    h = jnp.maximum(
        jnp.dot(y, w1_ref[...], preferred_element_type=jnp.float32), 0.0)  # (bt, Cr)
    g = jax.nn.sigmoid(
        jnp.dot(h, w2_ref[...], preferred_element_type=jnp.float32))       # (bt, C)

    # scale: re-read x from VMEM so the big block is not live across the matmuls
    out_ref[...] = (x_ref[...] * g[:, :, None]).astype(out_ref.dtype)


# ---------------------------------------------------------------------------
# Two-pass fallback kernels (oversize per-batch slabs, or B == 1 on small-VMEM
# parts where we want >= 2 parallel grid steps).
# ---------------------------------------------------------------------------
def _pool_kernel(x_ref, y_ref, *, inv_hw):
    # x_ref: (1, ct, HW) -> y_ref: (1, ct, 1)
    y_ref[...] = (
        jnp.sum(x_ref[...].astype(jnp.float32), axis=-1, keepdims=True) * inv_hw
    ).astype(y_ref.dtype)


def _scale_kernel(x_ref, g_ref, out_ref):
    # x_ref: (1, ct, HW)  g_ref: (1, ct, 1)
    out_ref[...] = (x_ref[...] * g_ref[...]).astype(out_ref.dtype)


# ---------------------------------------------------------------------------
# Helpers
# ---------------------------------------------------------------------------
def _vmem_capacity_bytes():
    try:
        return int(pltpu.get_tpu_info().vmem_capacity_bytes)
    except Exception:
        return 64 << 20  # conservative default (v7x per-TC VMEM)


def _legal_channel_tiles(c):
    # sublane block dim must be a multiple of 8 or the full channel extent
    return [d for d in range(1, c + 1) if c % d == 0 and (d % 8 == 0 or d == c)]


def _se_two_pass(x_flat, w1, w2, ct, vmem_cap):
    b, c, hw = x_flat.shape
    itemsize = x_flat.dtype.itemsize
    inv_hw = 1.0 / hw
    grid = (b, c // ct)
    vmem_cap_limit = vmem_cap * 3 // 4

    pool_vmem = int(min(max(4 * ct * hw * itemsize + (1 << 20), 8 << 20),
                        vmem_cap_limit))
    y = pl.pallas_call(
        functools.partial(_pool_kernel, inv_hw=inv_hw),
        out_shape=jax.ShapeDtypeStruct((b, c, 1), jnp.float32),
        grid_spec=pltpu.PrefetchScalarGridSpec(
            num_scalar_prefetch=0,
            grid=grid,
            in_specs=[pl.BlockSpec((1, ct, hw), lambda i, j: (i, j, 0))],
            out_specs=pl.BlockSpec((1, ct, 1), lambda i, j: (i, j, 0)),
        ),
        compiler_params=pltpu.CompilerParams(
            dimension_semantics=("parallel", "parallel"),
            vmem_limit_bytes=pool_vmem,
        ),
    )(x_flat)

    y2 = y[:, :, 0]                                        # (B, C) f32
    # Excitation is O(B*C*Cr): noise next to the byte-bound passes; plain XLA.
    h = jax.nn.relu(y2 @ w1.T.astype(jnp.float32))
    g = jax.nn.sigmoid(h @ w2.T.astype(jnp.float32))       # (B, C) f32
    g3 = g[:, :, None]

    scale_vmem = int(min(max(4 * ct * hw * itemsize + (2 << 20), 8 << 20),
                         vmem_cap_limit))
    out_flat = pl.pallas_call(
        _scale_kernel,
        out_shape=jax.ShapeDtypeStruct((b, c, hw), x_flat.dtype),
        grid_spec=pltpu.PrefetchScalarGridSpec(
            num_scalar_prefetch=0,
            grid=grid,
            in_specs=[
                pl.BlockSpec((1, ct, hw), lambda i, j: (i, j, 0)),
                pl.BlockSpec((1, ct, 1), lambda i, j: (i, j, 0)),
            ],
            out_specs=pl.BlockSpec((1, ct, hw), lambda i, j: (i, j, 0)),
        ),
        compiler_params=pltpu.CompilerParams(
            dimension_semantics=("parallel", "parallel"),
            vmem_limit_bytes=scale_vmem,
        ),
    )(x_flat, g3)
    return out_flat, y2


# ---------------------------------------------------------------------------
# Public wrapper
# ---------------------------------------------------------------------------
def se_layer(x, w1, w2):
    """x: (B, C, H, W); w1: (C//r, C); w2: (C, C//r) (PyTorch Linear layout)."""
    b, c, h, w = x.shape
    cr = w1.shape[0]
    hw = h * w
    itemsize = x.dtype.itemsize

    # Free view: no padding, no output slice (spatial axis is the full block dim).
    x_flat = x.reshape(b, c, hw)

    # --- generation-aware VMEM budget -------------------------------------
    vmem_cap = _vmem_capacity_bytes()               # 128 MiB v5e/v6e, 64 MiB v7x
    vmem_limit_cap = min(vmem_cap * 3 // 4, 100 << 20)   # ~48 MiB v7x, ~96 MiB v5e/v6e
    weight_bytes = 2 * c * cr * 4                   # W1^T + W2^T (f32)
    headroom = 2 << 20
    # x block + out block, each double-buffered => 4x the block footprint
    block_budget = max((vmem_limit_cap - 4 * weight_bytes - headroom) // 4, 1 << 20)
    target_block_bytes = min(
        block_budget, (16 << 20) if vmem_cap > (96 << 20) else (8 << 20))

    bytes_per_batch = c * hw * itemsize

    # --- choose batch tile for the fused path -----------------------------
    bt = 0
    for d in range(1, b + 1):
        if b % d:
            continue
        if d * bytes_per_batch > target_block_bytes:
            break
        if b >= 2 and b // d < 2:                   # keep >= 2 grid steps
            break
        bt = d

    # --- fused single pass vs. two-pass fallback --------------------------
    tiles = _legal_channel_tiles(c)
    small_vmem = vmem_cap <= (72 << 20)             # v7x-like part
    use_two_pass = bt == 0                          # per-batch slab exceeds budget
    if (not use_two_pass and b == 1 and small_vmem
            and bytes_per_batch >= (1 << 20) and any(c // d >= 2 for d in tiles)):
        # B == 1: a 1-step grid keeps one v7x TensorCore idle; split the work.
        use_two_pass = True

    if use_two_pass:
        ct_candidates = [d for d in tiles if d * hw * itemsize <= target_block_bytes]
        if b == 1:
            narrowed = [d for d in ct_candidates if c // d >= 2]
            ct_candidates = narrowed or ct_candidates
        ct = max(ct_candidates) if ct_candidates else min(tiles)
        # TODO(synk): extreme C*H*W where even an 8-channel slab overflows VMEM
        # would additionally need spatial tiling (masked stores) in the scale pass.
        out_flat, y2 = _se_two_pass(x_flat, w1, w2, ct, vmem_cap)
        return out_flat.reshape(b, c, h, w), y2.astype(x.dtype)

    grid = (b // bt,)
    block_bytes = bt * bytes_per_batch
    needed = 4 * block_bytes + 4 * weight_bytes + 4 * bt * c * 4 + headroom
    vmem_limit = int(min(max(needed, 8 << 20), vmem_limit_cap))

    # Pre-transpose the tiny weights so the kernel runs plain row-major matmuls.
    w1_t = w1.T   # (C, Cr)
    w2_t = w2.T   # (Cr, C)

    cost = pl.CostEstimate(
        flops=2 * b * c * hw + 4 * b * c * cr,
        transcendentals=b * c,
        bytes_accessed=2 * b * c * hw * itemsize
        + grid[0] * 2 * c * cr * 4
        + b * c * 4,
    )

    out_flat, y = pl.pallas_call(
        functools.partial(_se_fused_kernel, inv_hw=1.0 / hw),
        out_shape=(
            jax.ShapeDtypeStruct((b, c, hw), x.dtype),
            jax.ShapeDtypeStruct((b, 1, c), jnp.float32),
        ),
        grid_spec=pltpu.PrefetchScalarGridSpec(
            num_scalar_prefetch=0,
            grid=grid,
            in_specs=[
                pl.BlockSpec((bt, c, hw), lambda i: (i, 0, 0)),   # x batch tile
                pl.BlockSpec((c, cr), lambda i: (0, 0)),          # W1^T (whole)
                pl.BlockSpec((cr, c), lambda i: (0, 0)),          # W2^T (whole)
            ],
            out_specs=[
                pl.BlockSpec((bt, c, hw), lambda i: (i, 0, 0)),
                pl.BlockSpec((bt, 1, c), lambda i: (i, 0, 0)),
            ],
        ),
        compiler_params=pltpu.CompilerParams(
            dimension_semantics=("parallel",),
            vmem_limit_bytes=vmem_limit,
        ),
        cost_estimate=cost,
    )(x_flat, w1_t, w2_t)

    out = out_flat.reshape(b, c, h, w)
    return out, y.reshape(b, c).astype(x.dtype)


def reference_se(x, w1, w2):
    y = jnp.mean(x, axis=(2, 3))                     # (B, C)
    hh = jax.nn.relu(y @ w1.T)                       # (B, C//r)
    g = jax.nn.sigmoid(hh @ w2.T)                    # (B, C)
    return x * g[:, :, None, None], y


if __name__ == "__main__":
    key = jax.random.PRNGKey(0)
    kx, k1, k2 = jax.random.split(key, 3)

    B, C, H, W = 2, 32, 16, 16
    reduction = 16
    Cr = C // reduction                              # = 2

    x = jax.random.normal(kx, (B, C, H, W), dtype=jnp.float32)
    # Deterministic weight init (uniform, similar scale to PyTorch default).
    w1 = jax.random.uniform(k1, (Cr, C), dtype=jnp.float32,
                            minval=-1.0 / C ** 0.5, maxval=1.0 / C ** 0.5)
    w2 = jax.random.uniform(k2, (C, Cr), dtype=jnp.float32,
                            minval=-1.0 / Cr ** 0.5, maxval=1.0 / Cr ** 0.5)

    out, y = se_layer(x, w1, w2)
    jax.block_until_ready((out, y))

    out_ref, y_ref = reference_se(x, w1, w2)
    assert jnp.allclose(out, out_ref, atol=1e-5, rtol=1e-5), "output mismatch"
    assert jnp.allclose(y, y_ref, atol=1e-5, rtol=1e-5), "pooled y mismatch"

    print("KERNEL_OK")
</pallas_src>

<mosaic_0001>
module attributes {stable_mosaic.version = 11 : i64} {
  func.func @_se_fused_kernel(%arg0: i32, %arg1: memref<1x32x256xf32, #tpu.memory_space<vmem>>, %arg2: memref<32x2xf32, #tpu.memory_space<vmem>>, %arg3: memref<2x32xf32, #tpu.memory_space<vmem>>, %arg4: memref<1x32x256xf32, #tpu.memory_space<vmem>>, %arg5: memref<1x1x32xf32, #tpu.memory_space<vmem>>) attributes {dimension_semantics = [#tpu.dimension_semantics<parallel>], iteration_bounds = array<i64: 2>, scalar_prefetch = 0 : i64, scratch_operands = 0 : i64, tpu.core_type = #tpu.core_type<tc>, window_params = [{transform_indices = @transform_0, window_bounds = array<i64: 1, 32, 256>}, {pipeline_mode = #tpu.pipeline_mode<synchronous>, transform_indices = @transform_1, window_bounds = array<i64: 32, 2>}, {pipeline_mode = #tpu.pipeline_mode<synchronous>, transform_indices = @transform_2, window_bounds = array<i64: 2, 32>}, {transform_indices = @transform_3, window_bounds = array<i64: 1, 32, 256>}, {transform_indices = @transform_4, window_bounds = array<i64: 1, 1, 32>}]} {
    %c0 = arith.constant 0 : index
    %c0_0 = arith.constant 0 : index
    %c0_1 = arith.constant 0 : index
    %0 = vector.load %arg1[%c0, %c0_0, %c0_1] : memref<1x32x256xf32, #tpu.memory_space<vmem>>, vector<1x32x256xf32>
    %cst = arith.constant dense<0.000000e+00> : vector<1x32xf32>
    %1 = vector.multi_reduction <add>, %0, %cst [2] : vector<1x32x256xf32> to vector<1x32xf32>
    %cst_2 = arith.constant 3.906250e-03 : f32
    %2 = vector.broadcast %cst_2 : f32 to vector<1x32xf32>
    %3 = arith.mulf %1, %2 : vector<1x32xf32>
    %4 = vector.shape_cast %3 : vector<1x32xf32> to vector<1x1x32xf32>
    %c0_3 = arith.constant 0 : index
    %c0_4 = arith.constant 0 : index
    %c0_5 = arith.constant 0 : index
    %5 = vector.load %arg5[%c0_3, %c0_4, %c0_5] : memref<1x1x32xf32, #tpu.memory_space<vmem>>, vector<1x1x32xf32>
    tpu.vector_store %arg5[%c0_3, %c0_4, %c0_5], %4 {strides = array<i32>} : memref<1x1x32xf32, #tpu.memory_space<vmem>>, vector<1x1x32xf32>,
    %c0_6 = arith.constant 0 : index
    %c0_7 = arith.constant 0 : index
    %6 = vector.load %arg2[%c0_6, %c0_7] : memref<32x2xf32, #tpu.memory_space<vmem>>, vector<32x2xf32>
    %cst_8 = arith.constant dense<0.000000e+00> : vector<1x2xf32>
    %7 = tpu.matmul %3, %6, %cst_8 {dimension_numbers = #tpu.dot_dimension_numbers<[1], [0], [0], [1], [0, 0, 1, 1], [], []>} : vector<1x32xf32>, vector<32x2xf32>, vector<1x2xf32> -> vector<1x2xf32>
    %cst_9 = arith.constant 0.000000e+00 : f32
    %8 = vector.broadcast %cst_9 : f32 to vector<1x2xf32>
    %9 = arith.maximumf %7, %8 : vector<1x2xf32>
    %c0_10 = arith.constant 0 : index
    %c0_11 = arith.constant 0 : index
    %10 = vector.load %arg3[%c0_10, %c0_11] : memref<2x32xf32, #tpu.memory_space<vmem>>, vector<2x32xf32>
    %cst_12 = arith.constant dense<0.000000e+00> : vector<1x32xf32>
    %11 = tpu.matmul %9, %10, %cst_12 {dimension_numbers = #tpu.dot_dimension_numbers<[1], [0], [0], [1], [0, 0, 1, 1], [], []>} : vector<1x2xf32>, vector<2x32xf32>, vector<1x32xf32> -> vector<1x32xf32>
    %12 = arith.negf %11 : vector<1x32xf32>
    %13 = math.exp %12 : vector<1x32xf32>
    %cst_13 = arith.constant 1.000000e+00 : f32
    %14 = vector.broadcast %cst_13 : f32 to vector<1x32xf32>
    %15 = arith.addf %14, %13 : vector<1x32xf32>
    %16 = arith.divf %14, %15 : vector<1x32xf32>
    %c0_14 = arith.constant 0 : index
    %c0_15 = arith.constant 0 : index
    %c0_16 = arith.constant 0 : index
    %17 = vector.load %arg1[%c0_14, %c0_15, %c0_16] : memref<1x32x256xf32, #tpu.memory_space<vmem>>, vector<1x32x256xf32>
    %18 = vector.shape_cast %16 : vector<1x32xf32> to vector<1x32x1xf32>
    %19 = vector.broadcast %18 : vector<1x32x1xf32> to vector<1x32x256xf32>
    %20 = arith.mulf %17, %19 : vector<1x32x256xf32>
    %c0_17 = arith.constant 0 : index
    %c0_18 = arith.constant 0 : index
    %c0_19 = arith.constant 0 : index
    %21 = vector.load %arg4[%c0_17, %c0_18, %c0_19] : memref<1x32x256xf32, #tpu.memory_space<vmem>>, vector<1x32x256xf32>
    tpu.vector_store %arg4[%c0_17, %c0_18, %c0_19], %20 {strides = array<i32>} : memref<1x32x256xf32, #tpu.memory_space<vmem>>, vector<1x32x256xf32>,
    return
  }
  func.func @transform_0(%arg0: i32) -> (i32, i32, i32) {
    %c0_i32 = arith.constant 0 : i32
    %c0_i32_0 = arith.constant 0 : i32
    %c0_i32_1 = arith.constant 0 : i32
    return %arg0, %c0_i32, %c0_i32_0 : i32, i32, i32
  }
  func.func @transform_1(%arg0: i32) -> (i32, i32) {
    %c0_i32 = arith.constant 0 : i32
    %c0_i32_0 = arith.constant 0 : i32
    %c0_i32_1 = arith.constant 0 : i32
    return %c0_i32, %c0_i32_0 : i32, i32
  }
  func.func @transform_2(%arg0: i32) -> (i32, i32) {
    %c0_i32 = arith.constant 0 : i32
    %c0_i32_0 = arith.constant 0 : i32
    %c0_i32_1 = arith.constant 0 : i32
    return %c0_i32, %c0_i32_0 : i32, i32
  }
  func.func @transform_3(%arg0: i32) -> (i32, i32, i32) {
    %c0_i32 = arith.constant 0 : i32
    %c0_i32_0 = arith.constant 0 : i32
    %c0_i32_1 = arith.constant 0 : i32
    return %arg0, %c0_i32, %c0_i32_0 : i32, i32, i32
  }
  func.func @transform_4(%arg0: i32) -> (i32, i32, i32) {
    %c0_i32 = arith.constant 0 : i32
    %c0_i32_0 = arith.constant 0 : i32
    %c0_i32_1 = arith.constant 0 : i32
    return %arg0, %c0_i32, %c0_i32_0 : i32, i32, i32
  }
}

</mosaic_0001>

<llo_original>
// kernel: tpu_custom_call.1
$region0: #{tpu_custom_call.1}
  #allocation0 [shape = 'u32[]', space=smem, size = 0x4, offset = 0x4, fixed_abs, tag = 'smem constant byte address 0x4 - core index']
  #allocation1 [shape = 'u32[72,128]{1,0:T(1,128)}', space=vmem, size = 0x9000, scoped, tag = 'internal scratch']
  %s0 = inlined_call_operand.hbm [shape: f32[2,32,256], index: 0, kind: input, shape index: {}]
  %s1 = inlined_call_operand.vmem [shape: f32[32,2], index: 1, kind: input, shape index: {}]
  %s2 = inlined_call_operand.vmem [shape: f32[2,32], index: 2, kind: input, shape index: {}]
  %s3 = inlined_call_operand.hbm [shape: f32[2,32,256], index: 3, kind: output, shape index: {0}]
  %s4 = inlined_call_operand.hbm [shape: f32[2,1,32], index: 4, kind: output, shape index: {1}]
  %5 = xla_tuple %s3, %s4
  %s6 = sld [smem:[#allocation0]]
  $region57: #{tpu_custom_call.1} parent=0
    _
  %s8 = ssub.s32 1, %s6
  %s9 = scalar_select 0, %s8, %s6
  $region1: #{tpu_custom_call.1} parent=0
    #allocation2 [shape = 'u8[65536]{0}', space=vmem, size = 0x10000, scoped, tag = 'input window, operand 0']
    #allocation3 [shape = 's32[2]{0}', space=sflag, size = 0x8, scoped, tag = 'scoped memory for tpu_custom_call.1']
    #allocation4 [shape = 's32[2]{0}', space=sflag, size = 0x8, scoped, tag = 'scoped memory for tpu_custom_call.1']
    #allocation5 [shape = 'u8[65536]{0}', space=vmem, size = 0x10000, scoped, tag = 'output window, operand 0']
    #allocation6 [shape = 'u8[1024]{0}', space=vmem, size = 0x400, scoped, tag = 'output window, operand 1']
    #allocation7 [shape = 's32[2]{0}', space=sflag, size = 0x8, scoped, tag = 'scoped memory for tpu_custom_call.1']
    %10 = vsyncpa [#allocation3], 0
    %s11 = scalar_lea.sflag [#allocation3], 1
    %12 = vsyncpa %s11, 0
    %13 = vsyncpa [#allocation4], 0
    %s14 = scalar_lea.sflag [#allocation4], 1
    %15 = vsyncpa %s14, 0
    %16 = vsyncpa [#allocation7], 0
    %s17 = scalar_lea.sflag [#allocation7], 1
    %18 = vsyncpa %s17, 0
    loop: start=0, step=1, limit=4
    $region2: #{tpu_custom_call.1} parent=1 // loop_pre_header
      _
    $region3: #{tpu_custom_call.1} parent=1 // loop_header
      %s20 = sphi 0, %s24
      %p21 = scmp.ge.s32.totalorder %s20, 4
      %s30 = sphi 0, %s32
      %s33 = sphi 0, %s30
      %s34 = sphi 0, %s33
      %s50 = sphi 0, %s34
      %s54 = sphi 0, %s54
      %s56 = sphi 0, %s54
      %s57 = sphi 0, %s56
      %s71 = sphi 0, %s57
      %s75 = sphi 0, %s75
      %s77 = sphi 0, %s75
      %s78 = sphi 0, %s77
      %s92 = sphi 0, %s78
      %s98 = sphi 0, %s100
      %s101 = sphi 0, %s98
      %s102 = sphi 0, %s101
      %s118 = sphi 0, %s102
      %s124 = sphi 0, %s126
      %s127 = sphi 0, %s124
      %s128 = sphi 0, %s127
      %s144 = sphi 0, %s128
    $region4: #{tpu_custom_call.1} parent=1 // loop_header_branch
      %23 = sbr.rel (%p21) target = $region8
    $region5: #{tpu_custom_call.1} parent=1 // loop_body
      %s25 = ssub.s32 %s20, 1
      %s26 = ssub.s32 %s20, 2
      %s27 = sadd.s32 %s20, 1
      %s28 = ssub.s32 %s20, %s27
      %p29 = scmp.eq.s32.totalorder %s28, 0
      %s31 = sadd.s32 %s30, 1
      %s32 = scalar_select %p29, %s30, %s31
      %p35 = pneg %p29
      %p36 = scmp.eq.s32.totalorder %s20, 1
      %p37 = por %p35, %p36
      %p38 = scmp.ne.s32.totalorder %s30, %s33
      %p39 = scmp.eq.s32.totalorder %s20, 0
      %p40 = por %p38, %p39
      %p41 = scmp.ne.s32.totalorder %s30, %s33
      %p42 = scmp.eq.s32.totalorder %s25, 1
      %p43 = por %p41, %p42
      %p44 = scmp.ne.s32.totalorder %s33, %s34
      %p45 = scmp.eq.s32.totalorder %s25, 0
      %p46 = por %p44, %p45
      %p47 = scmp.ne.s32.totalorder %s33, %s34
      %p48 = scmp.eq.s32.totalorder %s26, 1
      %p49 = por %p47, %p48
      %p51 = scmp.ne.s32.totalorder %s34, %s50
      %p52 = scmp.eq.s32.totalorder %s26, 0
      %p53 = por %p51, %p52
      %s55 = sadd.s32 %s54, 1
      %p58 = scmp.eq.s32.totalorder %s20, 1
      %p59 = scmp.ne.s32.totalorder %s54, %s56
      %p60 = scmp.eq.s32.totalorder %s20, 0
      %p61 = por %p59, %p60
      %p62 = scmp.ne.s32.totalorder %s54, %s56
      %p63 = scmp.eq.s32.totalorder %s25, 1
      %p64 = por %p62, %p63
      %p65 = scmp.ne.s32.totalorder %s56, %s57
      %p66 = scmp.eq.s32.totalorder %s25, 0
      %p67 = por %p65, %p66
      %p68 = scmp.ne.s32.totalorder %s56, %s57
      %p69 = scmp.eq.s32.totalorder %s26, 1
      %p70 = por %p68, %p69
      %p72 = scmp.ne.s32.totalorder %s57, %s71
      %p73 = scmp.eq.s32.totalorder %s26, 0
      %p74 = por %p72, %p73
      %s76 = sadd.s32 %s75, 1
      %p79 = scmp.eq.s32.totalorder %s20, 1
      %p80 = scmp.ne.s32.totalorder %s75, %s77
      %p81 = scmp.eq.s32.totalorder %s20, 0
      %p82 = por %p80, %p81
      %p83 = scmp.ne.s32.totalorder %s75, %s77
      %p84 = scmp.eq.s32.totalorder %s25, 1
      %p85 = por %p83, %p84
      %p86 = scmp.ne.s32.totalorder %s77, %s78
      %p87 = scmp.eq.s32.totalorder %s25, 0
      %p88 = por %p86, %p87
      %p89 = scmp.ne.s32.totalorder %s77, %s78
      %p90 = scmp.eq.s32.totalorder %s26, 1
      %p91 = por %p89, %p90
      %p93 = scmp.ne.s32.totalorder %s78, %s92
      %p94 = scmp.eq.s32.totalorder %s26, 0
      %p95 = por %p93, %p94
      %s96 = ssub.s32 %s20, %s27
      %p97 = scmp.eq.s32.totalorder %s96, 0
      %s99 = sadd.s32 %s98, 1
      %s100 = scalar_select %p97, %s98, %s99
      %p103 = pneg %p97
      %p104 = scmp.eq.s32.totalorder %s20, 1
      %p105 = por %p103, %p104
      %p106 = scmp.ne.s32.totalorder %s98, %s101
      %p107 = scmp.eq.s32.totalorder %s20, 0
      %p108 = por %p106, %p107
      %p109 = scmp.ne.s32.totalorder %s98, %s101
      %p110 = scmp.eq.s32.totalorder %s25, 1
      %p111 = por %p109, %p110
      %p112 = scmp.ne.s32.totalorder %s101, %s102
      %p113 = scmp.eq.s32.totalorder %s25, 0
      %p114 = por %p112, %p113
      %p115 = scmp.ne.s32.totalorder %s101, %s102
      %p116 = scmp.eq.s32.totalorder %s26, 1
      %p117 = por %p115, %p116
      %p119 = scmp.ne.s32.totalorder %s102, %s118
      %p120 = scmp.eq.s32.totalorder %s26, 0
      %p121 = por %p119, %p120
      %s122 = ssub.s32 %s20, %s27
      %p123 = scmp.eq.s32.totalorder %s122, 0
      %s125 = sadd.s32 %s124, 1
      %s126 = scalar_select %p123, %s124, %s125
      %p129 = pneg %p123
      %p130 = scmp.eq.s32.totalorder %s20, 1
      %p131 = por %p129, %p130
      %p132 = scmp.ne.s32.totalorder %s124, %s127
      %p133 = scmp.eq.s32.totalorder %s20, 0
      %p134 = por %p132, %p133
      %p135 = scmp.ne.s32.totalorder %s124, %s127
      %p136 = scmp.eq.s32.totalorder %s25, 1
      %p137 = por %p135, %p136
      %p138 = scmp.ne.s32.totalorder %s127, %s128
      %p139 = scmp.eq.s32.totalorder %s25, 0
      %p140 = por %p138, %p139
      %p141 = scmp.ne.s32.totalorder %s127, %s128
      %p142 = scmp.eq.s32.totalorder %s26, 1
      %p143 = por %p141, %p142
      %p145 = scmp.ne.s32.totalorder %s128, %s144
      %p146 = scmp.eq.s32.totalorder %s26, 0
      %p147 = por %p145, %p146
      %p148 = scmp.le.s32.totalorder 1, %s20
      %p149 = scmp.lt.s32.totalorder %s20, 3
      %p150 = pnand %p148, %p149
      %p151 = pneg %p150
      // Predicated region
      $region9: #{tpu_custom_call.1} parent=5 // pred_check
        _
      $region10: #{tpu_custom_call.1} parent=5 // pred_check_branch
        %153 = sbr.rel (%p150) target = $region12
      $region11: #{tpu_custom_call.1} parent=5 // pred_region
        %s154 = ssub.s32 %s20, 1
        // Predicated region
        $region13: #{tpu_custom_call.1} parent=11 // pred_check
          %p155 = pneg %p67
        $region14: #{tpu_custom_call.1} parent=11 // pred_check_branch
          %157 = sbr.rel (%p155) target = $region16
        $region15: #{tpu_custom_call.1} parent=11 // pred_region
          _
        $region16: #{tpu_custom_call.1} parent=11 // pred_fallthru
          _
        // Predicated region
        $region17: #{tpu_custom_call.1} parent=11 // pred_check
          %p158 = pneg %p88
        $region18: #{tpu_custom_call.1} parent=11 // pred_check_branch
          %160 = sbr.rel (%p158) target = $region20
        $region19: #{tpu_custom_call.1} parent=11 // pred_region
          _
        $region20: #{tpu_custom_call.1} parent=11 // pred_fallthru
          _
      $region12: #{tpu_custom_call.1} parent=5 // pred_fallthru
        _
      %p161 = scmp.lt.s32.totalorder %s20, 2
      // Predicated region
      $region21: #{tpu_custom_call.1} parent=5 // pred_check
        %p162 = pneg %p161
      $region22: #{tpu_custom_call.1} parent=5 // pred_check_branch
        %164 = sbr.rel (%p162) target = $region24
      $region23: #{tpu_custom_call.1} parent=5 // pred_region
        // Predicated region
        $region25: #{tpu_custom_call.1} parent=23 // pred_check
          %p165 = pneg %p40
        $region26: #{tpu_custom_call.1} parent=23 // pred_check_branch
          %167 = sbr.rel (%p165) target = $region28
        $region27: #{tpu_custom_call.1} parent=23 // pred_region
          %s168 = sand.u32 %s30, 1
          %s169 = scalar_lea.sflag [#allocation3], %s168
          %s170 = sand.u32 %s30, 1
          %s171 = smul.addr %s170, 64
          %s172 = scalar_lea.vmem [#allocation2], %s171
          %174 = vsyncadd %s169, 0
          %s175 = smul.addr %s20, 8
          %s176 = smul.addr %s175, 8
          %s177 = scalar_lea.hbm %s0, %s176
          %s178 = sshll.u32 %s177, 4
          %s179 = int_to_ptr.hbm [resolvable:$true] %s178
          %s180 = sshll.u32 %s172, 4
          %s181 = int_to_ptr.vmem [resolvable:$true] %s180
          %186 = dma.hbm_to_vmem [thread:$0]  %s179, 1024, %s181, %s169, 256, 256, 16
        $region28: #{tpu_custom_call.1} parent=23 // pred_fallthru
          _
      $region24: #{tpu_custom_call.1} parent=5 // pred_fallthru
        _
      %p187 = scmp.le.s32.totalorder 1, %s20
      %p188 = scmp.lt.s32.totalorder %s20, 3
      %p189 = pnand %p187, %p188
      %p190 = pneg %p189
      // Predicated region
      $region29: #{tpu_custom_call.1} parent=5 // pred_check
        _
      $region30: #{tpu_custom_call.1} parent=5 // pred_check_branch
        %192 = sbr.rel (%p189) target = $region32
      $region31: #{tpu_custom_call.1} parent=5 // pred_region
        %s193 = ssub.s32 %s20, 1
        %s194 = sand.u32 %s33, 1
        %s195 = scalar_lea.sflag [#allocation3], %s194
        %s196 = sand.u32 %s33, 1
        %s197 = smul.addr %s196, 64
        %s198 = scalar_lea.vmem [#allocation2], %s197
        // Predicated region
        $region33: #{tpu_custom_call.1} parent=31 // pred_check
          %p199 = pneg %p46
        $region34: #{tpu_custom_call.1} parent=31 // pred_check_branch
          %201 = sbr.rel (%p199) target = $region36
        $region35: #{tpu_custom_call.1} parent=31 // pred_region
          %203 = dma.done %s195, 1024
        $region36: #{tpu_custom_call.1} parent=31 // pred_fallthru
          _
        %s204 = sand.u32 %s33, 1
        %s205 = scalar_lea.sflag [#allocation3], %s204
        %s206 = sand.u32 %s33, 1
        %s207 = smul.addr %s206, 64
        %s208 = scalar_lea.vmem [#allocation2], %s207
        %p209 = pneg %p46
        %p210 = pneg %p43
        %p211 = pneg %p67
        %p212 = pneg %p64
        %p213 = pneg %p88
        %p214 = pneg %p85
        %p215 = pneg %p114
        %p216 = pneg %p111
        %s217 = sand.u32 %s101, 1
        %s218 = scalar_lea.sflag [#allocation4], %s217
        %s219 = sand.u32 %s101, 1
        %s220 = smul.addr %s219, 64
        %s221 = scalar_lea.vmem [#allocation5], %s220
        %p222 = pneg %p140
        %p223 = pneg %p137
        %s224 = sand.u32 %s127, 1
        %s225 = scalar_lea.sflag [#allocation7], %s224
        %s226 = sand.u32 %s127, 1
        %s227 = scalar_lea.vmem [#allocation6], %s226
        %v228 = vld [vmem:[%s198] sm:$0xff]
        %v229 = vld [vmem:[%s198 + $0x8] sm:$0xff]
        %v230 = vld [vmem:[%s198 + $0x10] sm:$0xff]
        %v231 = vld [vmem:[%s198 + $0x18] sm:$0xff]
        %v232 = vld [vmem:[%s198 + $0x20] sm:$0xff]
        %v233 = vld [vmem:[%s198 + $0x28] sm:$0xff]
        %v234 = vld [vmem:[%s198 + $0x30] sm:$0xff]
        %v235 = vld [vmem:[%s198 + $0x38] sm:$0xff]
        %v236 = vadd.f32 %v228, %v229
        %237 = vadd.xlane.f32.xlu0 %v236
        %v238 = vpop.xlane.xlu0 %237
        %v239 = vadd.f32 %v230, %v231
        %240 = vadd.xlane.f32.xlu0 %v239
        %v241 = vpop.xlane.xlu0 %240
        %v242 = vadd.f32 %v232, %v233
        %243 = vadd.xlane.f32.xlu0 %v242
        %v244 = vpop.xlane.xlu0 %243
        %v245 = vadd.f32 %v234, %v235
        %246 = vadd.xlane.f32.xlu0 %v245
        %v247 = vpop.xlane.xlu0 %246
        %v248 = vmul.f32 %v238, 0.00390625
        %v249 = vmul.f32 %v241, 0.00390625
        %v250 = vmul.f32 %v244, 0.00390625
        %v251 = vmul.f32 %v247, 0.00390625
        %v256 = vlaneseq
        %v257 = vand.u32 %v256, 127
        %v258 = vperm.slane %v248, %v257
        %v259 = vadd.s32 %v257, 4294967288
        %v260 = vperm.slane %v249, %v259
        %vm261 = vcmask 130112
        %v262 = vsel %vm261, %v260, %v258
        %v263 = vadd.s32 %v257, 4294967280
        %v264 = vperm.slane %v250, %v263
        %vm265 = vcmask 195712
        %v266 = vsel %vm265, %v264, %v262
        %v267 = vadd.s32 %v257, 4294967272
        %v268 = vperm.slane %v251, %v267
        %vm269 = vcmask 261312
        %v270 = vsel %vm269, %v268, %v266
        %vm272 = vcmask 253952
        %273 = vst.msk [vmem:[%s227] sm:$0x1] %vm272, %v270
        %v274 = vld [vmem:[%s1] sm:$0xff]
        %v275 = vld [vmem:[%s1 + $0x8] sm:$0xff]
        %v276 = vld [vmem:[%s1 + $0x10] sm:$0xff]
        %v277 = vld [vmem:[%s1 + $0x18] sm:$0xff]
        %vm278 = vcmask 261120
        %v279 = vsel %vm278, %v270, 0
        %281 = vmatpush.msra.mxu0 0.0
        %282 = vmatpush.msra.mxu0 0.0
        %283 = vmatpush.msra.mxu0 0.0
        %284 = vmatpush.msra.mxu0 0.0
        %285 = vmatpush.msra.mxu0 0.0
        %286 = vmatpush.msra.mxu0 0.0
        %287 = vmatpush.msra.mxu0 0.0
        %288 = vmatpush.msra.mxu0 0.0
        %289 = vmatpush.msra.mxu0 0.0
        %290 = vmatpush.msra.mxu0 0.0
        %291 = vmatpush.msra.mxu0 0.0
        %292 = vmatpush.msra.mxu0 0.0
        %293 = vmatpush.msra.mxu0 %v277
        %294 = vmatpush.msra.mxu0 %v276
        %295 = vmatpush.msra.mxu0 %v275
        %296 = vmatpush.msra.mxu0 %v274
        %297 = vmatmul.f32.gmra.mxu0 %v279
        %v298 = vpop.f32.mrf.mxu0
        %v299 = vadd.f32 0.0, %v298
        %300 = vdwg.mxu0
        %v301 = vmax.f32 %v299, 0.0
        %v302 = vld [vmem:[%s2] sm:$0x3]
        %vm303 = vcmask 15360
        %v305 = vsel %vm303, %v301, 0
        %vm307 = vcmask 1041408
        %v309 = vsel %vm307, %v302, 0
        %311 = vmatpush.msra.mxu0 0.0
        %312 = vmatpush.msra.mxu0 0.0
        %313 = vmatpush.msra.mxu0 0.0
        %314 = vmatpush.msra.mxu0 0.0
        %315 = vmatpush.msra.mxu0 0.0
        %316 = vmatpush.msra.mxu0 0.0
        %317 = vmatpush.msra.mxu0 0.0
        %318 = vmatpush.msra.mxu0 0.0
        %319 = vmatpush.msra.mxu0 0.0
        %320 = vmatpush.msra.mxu0 0.0
        %321 = vmatpush.msra.mxu0 0.0
        %322 = vmatpush.msra.mxu0 0.0
        %323 = vmatpush.msra.mxu0 0.0
        %324 = vmatpush.msra.mxu0 0.0
        %325 = vmatpush.msra.mxu0 0.0
        %326 = vmatpush.msra.mxu0 %v309
        %327 = vmatmul.f32.gmra.mxu0 %v305
        %v328 = vpop.f32.mrf.mxu0
        %v329 = vadd.f32 0.0, %v328
        %330 = vdwg.mxu0
        %v331 = vxor.u32 %v329, 2147483648
        %v332 = vmul.f32 %v331, 1.442695
        %v333 = vpow.pop %v332
        %v334 = vadd.f32 %v333, 1.0
        %v335 = vrcp.pop %v334
        %v336 = vmul.f32 %v334, %v335
        %v337 = vsub.f32 1.0, %v336
        %v338 = vmul.f32 %v335, %v337
        %v339 = vadd.f32 %v335, %v338
        %vm340 = vweird.f32 %v334
        %vm341 = vweird.f32 %v335
        %vm342 = vmor %vm340, %vm341
        %v343 = vsel %vm342, %v335, %v339
        %v344 = vand.u32 2147483647, %v334
        %vm345 = vcmp.eq.f32.partialorder %v344, 8.507059e+37
        %v346 = vand.u32 %v334, 2147483648
        %v347 = vor.u32 1.1754944e-38, %v346
        %v348 = vsel %vm345, %v347, %v343
        %v349 = vmul.f32 1.0, %v348
        %v350 = vld [vmem:[%s198] sm:$0xff]
        %v351 = vld [vmem:[%s198 + $0x8] sm:$0xff]
        %v352 = vld [vmem:[%s198 + $0x10] sm:$0xff]
        %v353 = vld [vmem:[%s198 + $0x18] sm:$0xff]
        %v354 = vld [vmem:[%s198 + $0x20] sm:$0xff]
        %v355 = vld [vmem:[%s198 + $0x28] sm:$0xff]
        %v356 = vld [vmem:[%s198 + $0x30] sm:$0xff]
        %v357 = vld [vmem:[%s198 + $0x38] sm:$0xff]
        %v358 = vperm.slane %v349, 0
        %v359 = vlaneseq
        %v360 = vshrl.u32 %v359, 7
        %362 = vset.pattern.permute.xlu0 %v360
        %363 = vperm.xlu0 %362, %v358
        %v364 = vpop.permute.xlu0 %363
        %v365 = vlaneseq
        %v366 = vshrl.u32 %v365, 7
        %v367 = vadd.s32 %v366, 8
        %368 = vset.pattern.permute.xlu0 %v367
        %369 = vperm.xlu0 %368, %v358
        %v370 = vpop.permute.xlu0 %369
        %v371 = vlaneseq
        %v372 = vshrl.u32 %v371, 7
        %v373 = vadd.s32 %v372, 16
        %374 = vset.pattern.permute.xlu0 %v373
        %375 = vperm.xlu0 %374, %v358
        %v376 = vpop.permute.xlu0 %375
        %v377 = vlaneseq
        %v378 = vshrl.u32 %v377, 7
        %v379 = vadd.s32 %v378, 24
        %380 = vset.pattern.permute.xlu0 %v379
        %381 = vperm.xlu0 %380, %v358
        %v382 = vpop.permute.xlu0 %381
        %v383 = vmul.f32 %v350, %v364
        %v384 = vmul.f32 %v351, %v364
        %v385 = vmul.f32 %v352, %v370
        %v386 = vmul.f32 %v353, %v370
        %v387 = vmul.f32 %v354, %v376
        %v388 = vmul.f32 %v355, %v376
        %v389 = vmul.f32 %v356, %v382
        %v390 = vmul.f32 %v357, %v382
        %391 = vst [vmem:[%s221] sm:$0xff] %v383
        %392 = vst [vmem:[%s221 + $0x8] sm:$0xff] %v384
        %393 = vst [vmem:[%s221 + $0x10] sm:$0xff] %v385
        %394 = vst [vmem:[%s221 + $0x18] sm:$0xff] %v386
        %395 = vst [vmem:[%s221 + $0x20] sm:$0xff] %v387
        %396 = vst [vmem:[%s221 + $0x28] sm:$0xff] %v388
        %397 = vst [vmem:[%s221 + $0x30] sm:$0xff] %v389
        %398 = vst [vmem:[%s221 + $0x38] sm:$0xff] %v390
        %s399 = sand.u32 %s101, 1
        %s400 = scalar_lea.sflag [#allocation4], %s399
        %s401 = sand.u32 %s101, 1
        %s402 = smul.addr %s401, 64
        %s403 = scalar_lea.vmem [#allocation5], %s402
        %s404 = sand.u32 %s127, 1
        %s405 = scalar_lea.sflag [#allocation7], %s404
        %s406 = sand.u32 %s127, 1
        %s407 = scalar_lea.vmem [#allocation6], %s406
        // Predicated region
        $region37: #{tpu_custom_call.1} parent=31 // pred_check
          %p408 = pneg %p111
        $region38: #{tpu_custom_call.1} parent=31 // pred_check_branch
          %410 = sbr.rel (%p408) target = $region40
        $region39: #{tpu_custom_call.1} parent=31 // pred_region
          %412 = vsyncadd %s400, 0
          %s413 = smul.addr %s25, 8
          %s414 = smul.addr %s413, 8
          %s415 = scalar_lea.hbm %s3, %s414
          %s416 = sshll.u32 %s403, 4
          %s417 = int_to_ptr.vmem [resolvable:$true] %s416
          %s418 = sshll.u32 %s415, 4
          %s419 = int_to_ptr.hbm [resolvable:$true] %s418
          %424 = dma.vmem_to_hbm [thread:$0]  %s417, 1024, %s419, %s400, 256, 256, 16
        $region40: #{tpu_custom_call.1} parent=31 // pred_fallthru
          _
        // Predicated region
        $region41: #{tpu_custom_call.1} parent=31 // pred_check
          %p425 = pneg %p137
        $region42: #{tpu_custom_call.1} parent=31 // pred_check_branch
          %427 = sbr.rel (%p425) target = $region44
        $region43: #{tpu_custom_call.1} parent=31 // pred_region
          %429 = vsyncadd %s405, 0
          %s430 = scalar_lea.hbm %s4, %s25
          %s432 = sshll.u32 %s407, 4
          %s433 = int_to_ptr.vmem [resolvable:$true] %s432
          %s434 = sshll.u32 %s430, 4
          %s435 = int_to_ptr.hbm [resolvable:$true] %s434
          %437 = dma.vmem_to_hbm [thread:$0]  %s433, 16, %s435, %s405
        $region44: #{tpu_custom_call.1} parent=31 // pred_fallthru
          _
      $region32: #{tpu_custom_call.1} parent=5 // pred_fallthru
        _
      %p438 = scmp.le.s32.totalorder 2, %s20
      // Predicated region
      $region45: #{tpu_custom_call.1} parent=5 // pred_check
        %p439 = pneg %p438
      $region46: #{tpu_custom_call.1} parent=5 // pred_check_branch
        %441 = sbr.rel (%p439) target = $region48
      $region47: #{tpu_custom_call.1} parent=5 // pred_region
        %s442 = ssub.s32 %s20, 2
        // Predicated region
        $region49: #{tpu_custom_call.1} parent=47 // pred_check
          %p443 = pneg %p117
        $region50: #{tpu_custom_call.1} parent=47 // pred_check_branch
          %445 = sbr.rel (%p443) target = $region52
        $region51: #{tpu_custom_call.1} parent=47 // pred_region
          %s446 = sand.u32 %s102, 1
          %s447 = scalar_lea.sflag [#allocation4], %s446
          %s448 = sand.u32 %s102, 1
          %s449 = smul.addr %s448, 64
          %s450 = scalar_lea.vmem [#allocation5], %s449
          %452 = dma.done %s447, 1024
        $region52: #{tpu_custom_call.1} parent=47 // pred_fallthru
          _
        // Predicated region
        $region53: #{tpu_custom_call.1} parent=47 // pred_check
          %p453 = pneg %p143
        $region54: #{tpu_custom_call.1} parent=47 // pred_check_branch
          %455 = sbr.rel (%p453) target = $region56
        $region55: #{tpu_custom_call.1} parent=47 // pred_region
          %s456 = sand.u32 %s128, 1
          %s457 = scalar_lea.sflag [#allocation7], %s456
          %s458 = sand.u32 %s128, 1
          %s459 = scalar_lea.vmem [#allocation6], %s458
          %461 = dma.done %s457, 16
        $region56: #{tpu_custom_call.1} parent=47 // pred_fallthru
          _
      $region48: #{tpu_custom_call.1} parent=5 // pred_fallthru
        _
    $region6: #{tpu_custom_call.1} parent=1 // loop_footer
      %s24 = sadd.s32 1, %s20
    $region7: #{tpu_custom_call.1} parent=1 // loop_footer_branch
      %19 = sbr.rel target = $region3
    $region8: #{tpu_custom_call.1} parent=1 // loop_exit
      _
    %462 = vsyncpa [#allocation3], 1
    %s463 = scalar_lea.sflag [#allocation3], 1
    %464 = vsyncpa %s463, 1
    %465 = vsyncpa [#allocation4], 1
    %s466 = scalar_lea.sflag [#allocation4], 1
    %467 = vsyncpa %s466, 1
    %468 = vsyncpa [#allocation7], 1
    %s469 = scalar_lea.sflag [#allocation7], 1
    %470 = vsyncpa %s469, 1

</llo_original>
